<compile_context>
chip_gen: v6e
topology: v6e:2x2x1
jax: 0.10.0
libtpu: 0.0.40
codegen_flags: <defaults>
</compile_context>

<pallas_src>
import jax
import jax.numpy as jnp
from jax.experimental import pallas as pl
from jax.experimental.pallas import tpu as pltpu

EPSILON = 1e-10
NEG_BIG = -1e30  # padded-class bias: exp(NEG_BIG - max) underflows to 0


def _disc_kernel(ids_ref, hidden_ref, w_ref, b_ref, out_ref, acc_ref, cnt_ref):
    """Masked-sum pooling accumulated over S-tiles; classifier + log_softmax
    on the last S step.

    ids_ref:    (TB, TS)      int32       token ids (0 == pad)
    hidden_ref: (TB, TS, E)   bf16 / f32  encoder hidden states
    w_ref:      (E, CPAD)     float32     classifier weight (pre-transposed, padded)
    b_ref:      (1, CPAD)     float32     classifier bias (padded cols = -1e30)
    out_ref:    (TB, CPAD)    float32     log-probabilities (lane-dense)
    acc_ref:    (TB, E)       float32     masked-sum accumulator (scratch)
    cnt_ref:    (TB, 1)       float32     token-count accumulator (scratch)
    """
    s_idx = pl.program_id(1)

    @pl.when(s_idx == 0)
    def _():
        acc_ref[...] = jnp.zeros_like(acc_ref)
        cnt_ref[...] = jnp.zeros_like(cnt_ref)

    ids = ids_ref[...]                               # (TB, TS) int32
    not_pad = ids != 0
    mask_f = not_pad.astype(jnp.float32)             # (TB, TS) for the count
    mask_h = not_pad.astype(hidden_ref.dtype)        # exact 0/1 in hidden dtype

    tb = ids.shape[0]
    # Masked-sum pooling on the MXU: einsum('bs,bse->be') written as TB
    # per-row (1,TS)x(TS,E) matmuls (exact 0/1 multiply, f32 accumulation).
    # No (TB,TS,E) f32 upcast / masked-product temporaries, so per-step live
    # VMEM stays ~ the input window itself.
    pooled = jnp.concatenate(
        [jnp.dot(mask_h[b:b + 1, :], hidden_ref[b],
                 preferred_element_type=jnp.float32)
         for b in range(tb)],
        axis=0)                                      # (TB, E) f32
    acc_ref[...] += pooled
    cnt_ref[...] += jnp.sum(mask_f, axis=1, keepdims=True)   # (TB, 1)

    @pl.when(s_idx == pl.num_programs(1) - 1)
    def _():
        # avg_hidden = sum(masked_hidden) / (sum(mask) + eps); the mask count
        # is constant across E, so a (TB,1) denom broadcast is identical to
        # the PyTorch (B,S,E)-mask reduction.
        avg = acc_ref[...] / (cnt_ref[...] + EPSILON)            # (TB, E)

        logits = jnp.dot(avg, w_ref[...],
                         preferred_element_type=jnp.float32) + b_ref[...]

        # log_softmax, numerically stable; padded lanes hold ~-1e30 so they
        # contribute exp()==0 to the logsumexp. NOTE: padded output lanes are
        # garbage (~-1e30) until the wrapper slices back to num_classes.
        m = jnp.max(logits, axis=-1, keepdims=True)
        shifted = logits - m
        lse = jnp.log(jnp.sum(jnp.exp(shifted), axis=-1, keepdims=True))
        out_ref[...] = shifted - lse


def prepare_classifier_params(weight, bias):
    """One-time prep (outside the per-call path): transpose torch-Linear
    weight (C,E) -> (E, CPAD) and pad classes to a lane-dense multiple of 128.
    Padded weight cols are zero, padded bias entries are -1e30."""
    C, E = weight.shape
    cpad = ((C + 127) // 128) * 128
    w_t = jnp.zeros((E, cpad), jnp.float32)
    w_t = w_t.at[:, :C].set(jnp.transpose(weight).astype(jnp.float32))
    b_p = jnp.full((1, cpad), NEG_BIG, jnp.float32)
    b_p = b_p.at[0, :C].set(bias.astype(jnp.float32))
    return w_t, b_p, C


def _pick_b_tile(B):
    # TODO(synk): for B <= 8 there is a single B-program, so on v7x the second
    # TensorCore idles; fixing that needs a core-parallel S split + wrapper
    # combine (see header note).
    if B <= 8:
        return B
    for tb in (8, 16, 32):
        if B % tb == 0:
            return tb
    return B


def _pick_s_tile(S, row_bytes):
    """Largest S-tile (multiple of 128, dividing S) whose hidden window stays
    under ~8 MiB per pipeline buffer — safe with the explicit 32–48 MiB VMEM
    limit on every generation (v7x 64 MiB physical is the binding case)."""
    if S <= 128:
        return S
    budget = 8 << 20
    divisors = [ts for ts in (1024, 512, 384, 256, 128) if S % ts == 0]
    if not divisors:
        return S
    for ts in divisors:
        if ts * row_bytes <= budget:
            return ts
    return divisors[-1]


def discriminator_forward(x_ids, hidden, w_padded, b_padded, num_classes):
    """x_ids: (B,S) int32; hidden: (B,S,E) bf16 or f32 (consumed as-is, no
    wrapper cast); w_padded/b_padded from prepare_classifier_params.
    Returns (B, num_classes) f32 log-probs."""
    B, S = x_ids.shape
    E = hidden.shape[-1]
    cpad = w_padded.shape[-1]
    elt = jnp.dtype(hidden.dtype).itemsize

    TB = _pick_b_tile(B)
    TS = _pick_s_tile(S, TB * E * elt)
    grid = (pl.cdiv(B, TB), pl.cdiv(S, TS))

    # Explicit VMEM budget: double-buffered pipeline windows + scratch + a
    # tile of temporary headroom, clamped to [32 MiB, 48 MiB] which is legal
    # on v5e (16 MiB scoped default), v6e (32 MiB) and v7x (64 MiB physical).
    hid_blk = TB * TS * E * elt
    ids_blk = TB * TS * 4
    w_blk = E * cpad * 4
    io_blk = (TB + 8) * cpad * 4
    scratch_bytes = TB * (E + 128) * 4
    est = 2 * (hid_blk + ids_blk + w_blk + io_blk) + scratch_bytes + hid_blk
    vmem_limit = int(min(max(est + (4 << 20), 32 << 20), 48 << 20))

    # Tell XLA this kernel is HBM-bound on the (B,S,E) read.
    cost = pl.CostEstimate(
        flops=2 * B * S * E + 2 * B * E * cpad,
        transcendentals=B * cpad,
        bytes_accessed=B * S * E * elt + B * S * 4 + E * cpad * 4 + B * cpad * 4,
    )

    out_padded = pl.pallas_call(
        _disc_kernel,
        out_shape=jax.ShapeDtypeStruct((B, cpad), jnp.float32),
        grid_spec=pltpu.PrefetchScalarGridSpec(
            num_scalar_prefetch=0,
            grid=grid,
            in_specs=[
                pl.BlockSpec((TB, TS), lambda b, s: (b, s)),        # ids
                pl.BlockSpec((TB, TS, E), lambda b, s: (b, s, 0)),  # hidden
                # Grid-invariant classifier operands (constant block index →
                # fetched once). Default buffering kept: Buffered(1) saves
                # <1 MiB and is not worth the lowering risk here.
                pl.BlockSpec((E, cpad), lambda b, s: (0, 0)),       # weight
                pl.BlockSpec((1, cpad), lambda b, s: (0, 0)),       # bias
            ],
            out_specs=pl.BlockSpec((TB, cpad), lambda b, s: (b, 0)),
            scratch_shapes=[
                pltpu.VMEM((TB, E), jnp.float32),   # masked-sum accumulator
                pltpu.VMEM((TB, 1), jnp.float32),   # token-count accumulator
            ],
        ),
        compiler_params=pltpu.CompilerParams(
            dimension_semantics=("parallel", "arbitrary"),
            vmem_limit_bytes=vmem_limit,
        ),
        cost_estimate=cost,
    )(x_ids, hidden, w_padded, b_padded)

    return out_padded[:, :num_classes]


def _reference_forward(x_ids, hidden, weight, bias):
    """Pure-JAX reference of the PyTorch forward on the same hidden states."""
    h = hidden.astype(jnp.float32)
    mask = (x_ids != 0).astype(jnp.float32)
    summed = jnp.sum(h * mask[:, :, None], axis=1)
    denom = jnp.sum(mask, axis=1, keepdims=True) + EPSILON
    avg = summed / denom
    logits = avg @ weight.T + bias
    return jax.nn.log_softmax(logits, axis=-1)


if __name__ == "__main__":
    # Small shapes consistent with the module: batch=2, seq=8, embed=32, classes=4
    B, S, E, C = 2, 8, 32, 4
    VOCAB = 50

    key = jax.random.PRNGKey(0)
    k_ids, k_emb, k_w, k_b = jax.random.split(key, 4)

    # Token ids with padding (0): row 0 has two trailing pads, row 1 is ALL
    # padding (exercises the eps-denominator / avg==0 path).
    x_ids = jax.random.randint(k_ids, (B, S), 1, VOCAB, dtype=jnp.int32)
    x_ids = x_ids.at[0, -2:].set(0)
    x_ids = x_ids.at[1, :].set(0)

    # Synthetic deterministic "encoder" standing in for GPT2: emits bf16
    # hidden states directly (no separate wrapper cast pass).
    embed_table = (jax.random.normal(k_emb, (VOCAB, E), dtype=jnp.float32)
                   * 0.02).astype(jnp.bfloat16)
    hidden = embed_table[x_ids]      # (B, S, E) bf16 — glue, not the hot path

    # ClassificationHead parameters (torch.nn.Linear(embed_size, class_size)).
    weight = jax.random.normal(k_w, (C, E), dtype=jnp.float32) * 0.02
    bias = jax.random.normal(k_b, (C,), dtype=jnp.float32) * 0.02

    # One-time classifier prep (hoisted off the per-call path).
    w_padded, b_padded, num_classes = prepare_classifier_params(weight, bias)

    log_probs = discriminator_forward(x_ids, hidden, w_padded, b_padded,
                                      num_classes)
    jax.block_until_ready(log_probs)

    # sanity: shape, normalization, and match against pure-JAX reference
    assert log_probs.shape == (B, C)
    row_sums = jnp.sum(jnp.exp(log_probs), axis=-1)
    assert bool(jnp.all(jnp.abs(row_sums - 1.0) < 1e-4))
    ref = _reference_forward(x_ids, hidden, weight, bias)
    assert bool(jnp.all(jnp.abs(log_probs - ref) < 1e-4))

    print("KERNEL_OK")
</pallas_src>

<mosaic_0001>
module attributes {stable_mosaic.version = 11 : i64} {
  func.func @_disc_kernel(%arg0: i32, %arg1: i32, %arg2: memref<2x8xi32, #tpu.memory_space<vmem>>, %arg3: memref<2x8x32xbf16, #tpu.memory_space<vmem>>, %arg4: memref<32x128xf32, #tpu.memory_space<vmem>>, %arg5: memref<1x128xf32, #tpu.memory_space<vmem>>, %arg6: memref<2x128xf32, #tpu.memory_space<vmem>>, %arg7: memref<2x32xf32, #tpu.memory_space<vmem>>, %arg8: memref<2x1xf32, #tpu.memory_space<vmem>>) attributes {dimension_semantics = [#tpu.dimension_semantics<parallel>, #tpu.dimension_semantics<arbitrary>], iteration_bounds = array<i64: 1, 1>, scalar_prefetch = 0 : i64, scratch_operands = 2 : i64, tpu.core_type = #tpu.core_type<tc>, window_params = [{transform_indices = @transform_0, window_bounds = array<i64: 2, 8>}, {transform_indices = @transform_1, window_bounds = array<i64: 2, 8, 32>}, {pipeline_mode = #tpu.pipeline_mode<synchronous>, transform_indices = @transform_2, window_bounds = array<i64: 32, 128>}, {pipeline_mode = #tpu.pipeline_mode<synchronous>, transform_indices = @transform_3, window_bounds = array<i64: 1, 128>}, {transform_indices = @transform_4, window_bounds = array<i64: 2, 128>}]} {
    %c0_i32 = arith.constant 0 : i32
    %0 = arith.cmpi eq, %arg1, %c0_i32 : i32
    %1 = arith.extui %0 : i1 to i32
    %c0_i32_0 = arith.constant 0 : i32
    %2 = arith.cmpi ne, %1, %c0_i32_0 : i32
    scf.if %2 {
      %cst_20 = arith.constant 0.000000e+00 : f32
      %31 = vector.broadcast %cst_20 : f32 to vector<2x32xf32>
      %c0_21 = arith.constant 0 : index
      %c0_22 = arith.constant 0 : index
      %32 = vector.load %arg7[%c0_21, %c0_22] : memref<2x32xf32, #tpu.memory_space<vmem>>, vector<2x32xf32>
      tpu.vector_store %arg7[%c0_21, %c0_22], %31 {strides = array<i32>} : memref<2x32xf32, #tpu.memory_space<vmem>>, vector<2x32xf32>,
      %cst_23 = arith.constant 0.000000e+00 : f32
      %33 = vector.broadcast %cst_23 : f32 to vector<2x1xf32>
      %c0_24 = arith.constant 0 : index
      %c0_25 = arith.constant 0 : index
      %34 = vector.load %arg8[%c0_24, %c0_25] : memref<2x1xf32, #tpu.memory_space<vmem>>, vector<2x1xf32>
      tpu.vector_store %arg8[%c0_24, %c0_25], %33 {strides = array<i32>} : memref<2x1xf32, #tpu.memory_space<vmem>>, vector<2x1xf32>,
    } else {
    }
    %c0 = arith.constant 0 : index
    %c0_1 = arith.constant 0 : index
    %3 = vector.load %arg2[%c0, %c0_1] : memref<2x8xi32, #tpu.memory_space<vmem>>, vector<2x8xi32>
    %c0_i32_2 = arith.constant 0 : i32
    %4 = vector.broadcast %c0_i32_2 : i32 to vector<2x8xi32>
    %5 = arith.cmpi ne, %3, %4 : vector<2x8xi32>
    %6 = arith.extui %5 : vector<2x8xi1> to vector<2x8xi32>
    %7 = arith.sitofp %6 : vector<2x8xi32> to vector<2x8xf32>
    %8 = arith.extui %5 : vector<2x8xi1> to vector<2x8xi32>
    %9 = arith.sitofp %8 : vector<2x8xi32> to vector<2x8xf32>
    %10 = arith.truncf %9 : vector<2x8xf32> to vector<2x8xbf16>
    %11 = vector.extract_strided_slice %10 {offsets = [0, 0], sizes = [1, 8], strides = [1, 1]} : vector<2x8xbf16> to vector<1x8xbf16>
    %c0_3 = arith.constant 0 : index
    %c0_4 = arith.constant 0 : index
    %c0_5 = arith.constant 0 : index
    %12 = vector.load %arg3[%c0_3, %c0_4, %c0_5] : memref<2x8x32xbf16, #tpu.memory_space<vmem>>, vector<1x8x32xbf16>
    %13 = vector.shape_cast %12 : vector<1x8x32xbf16> to vector<8x32xbf16>
    %cst = arith.constant dense<0.000000e+00> : vector<1x32xf32>
    %14 = tpu.matmul %11, %13, %cst {dimension_numbers = #tpu.dot_dimension_numbers<[1], [0], [0], [1], [0, 0, 1, 1], [], []>} : vector<1x8xbf16>, vector<8x32xbf16>, vector<1x32xf32> -> vector<1x32xf32>
    %15 = vector.extract_strided_slice %10 {offsets = [1, 0], sizes = [1, 8], strides = [1, 1]} : vector<2x8xbf16> to vector<1x8xbf16>
    %c1 = arith.constant 1 : index
    %c0_6 = arith.constant 0 : index
    %c0_7 = arith.constant 0 : index
    %16 = vector.load %arg3[%c1, %c0_6, %c0_7] : memref<2x8x32xbf16, #tpu.memory_space<vmem>>, vector<1x8x32xbf16>
    %17 = vector.shape_cast %16 : vector<1x8x32xbf16> to vector<8x32xbf16>
    %cst_8 = arith.constant dense<0.000000e+00> : vector<1x32xf32>
    %18 = tpu.matmul %15, %17, %cst_8 {dimension_numbers = #tpu.dot_dimension_numbers<[1], [0], [0], [1], [0, 0, 1, 1], [], []>} : vector<1x8xbf16>, vector<8x32xbf16>, vector<1x32xf32> -> vector<1x32xf32>
    %19 = tpu.concatenate %14, %18 in 0 : vector<1x32xf32>, vector<1x32xf32> -> vector<2x32xf32>
    %c0_9 = arith.constant 0 : index
    %c0_10 = arith.constant 0 : index
    %20 = vector.load %arg7[%c0_9, %c0_10] : memref<2x32xf32, #tpu.memory_space<vmem>>, vector<2x32xf32>
    %21 = arith.addf %20, %19 : vector<2x32xf32>
    %c0_11 = arith.constant 0 : index
    %c0_12 = arith.constant 0 : index
    %22 = vector.load %arg7[%c0_11, %c0_12] : memref<2x32xf32, #tpu.memory_space<vmem>>, vector<2x32xf32>
    tpu.vector_store %arg7[%c0_11, %c0_12], %21 {strides = array<i32>} : memref<2x32xf32, #tpu.memory_space<vmem>>, vector<2x32xf32>,
    %c0_13 = arith.constant 0 : index
    %c0_14 = arith.constant 0 : index
    %23 = vector.load %arg8[%c0_13, %c0_14] : memref<2x1xf32, #tpu.memory_space<vmem>>, vector<2x1xf32>
    %cst_15 = arith.constant dense<0.000000e+00> : vector<2xf32>
    %24 = vector.multi_reduction <add>, %7, %cst_15 [1] : vector<2x8xf32> to vector<2xf32>
    %25 = vector.shape_cast %24 : vector<2xf32> to vector<2x1xf32>
    %26 = arith.addf %23, %25 : vector<2x1xf32>
    %c0_16 = arith.constant 0 : index
    %c0_17 = arith.constant 0 : index
    %27 = vector.load %arg8[%c0_16, %c0_17] : memref<2x1xf32, #tpu.memory_space<vmem>>, vector<2x1xf32>
    tpu.vector_store %arg8[%c0_16, %c0_17], %26 {strides = array<i32>} : memref<2x1xf32, #tpu.memory_space<vmem>>, vector<2x1xf32>,
    %c0_i32_18 = arith.constant 0 : i32
    %28 = arith.cmpi eq, %arg1, %c0_i32_18 : i32
    %29 = arith.extui %28 : i1 to i32
    %c0_i32_19 = arith.constant 0 : i32
    %30 = arith.cmpi ne, %29, %c0_i32_19 : i32
    scf.if %30 {
      %c0_20 = arith.constant 0 : index
      %c0_21 = arith.constant 0 : index
      %31 = vector.load %arg7[%c0_20, %c0_21] : memref<2x32xf32, #tpu.memory_space<vmem>>, vector<2x32xf32>
      %c0_22 = arith.constant 0 : index
      %c0_23 = arith.constant 0 : index
      %32 = vector.load %arg8[%c0_22, %c0_23] : memref<2x1xf32, #tpu.memory_space<vmem>>, vector<2x1xf32>
      %cst_24 = arith.constant 1.000000e-10 : f32
      %33 = vector.broadcast %cst_24 : f32 to vector<2x1xf32>
      %34 = arith.addf %32, %33 : vector<2x1xf32>
      %35 = vector.broadcast %34 : vector<2x1xf32> to vector<2x32xf32>
      %36 = arith.divf %31, %35 : vector<2x32xf32>
      %c0_25 = arith.constant 0 : index
      %c0_26 = arith.constant 0 : index
      %37 = vector.load %arg4[%c0_25, %c0_26] : memref<32x128xf32, #tpu.memory_space<vmem>>, vector<32x128xf32>
      %cst_27 = arith.constant dense<0.000000e+00> : vector<2x128xf32>
      %38 = tpu.matmul %36, %37, %cst_27 {dimension_numbers = #tpu.dot_dimension_numbers<[1], [0], [0], [1], [0, 0, 1, 1], [], []>} : vector<2x32xf32>, vector<32x128xf32>, vector<2x128xf32> -> vector<2x128xf32>
      %c0_28 = arith.constant 0 : index
      %c0_29 = arith.constant 0 : index
      %39 = vector.load %arg5[%c0_28, %c0_29] : memref<1x128xf32, #tpu.memory_space<vmem>>, vector<1x128xf32>
      %40 = vector.broadcast %39 : vector<1x128xf32> to vector<2x128xf32>
      %41 = arith.addf %38, %40 : vector<2x128xf32>
      %cst_30 = arith.constant dense<0xFF800000> : vector<2xf32>
      %42 = vector.multi_reduction <maximumf>, %41, %cst_30 [1] : vector<2x128xf32> to vector<2xf32>
      %43 = vector.shape_cast %42 : vector<2xf32> to vector<2x1xf32>
      %44 = vector.broadcast %43 : vector<2x1xf32> to vector<2x128xf32>
      %45 = arith.subf %41, %44 : vector<2x128xf32>
      %46 = math.exp %45 : vector<2x128xf32>
      %cst_31 = arith.constant dense<0.000000e+00> : vector<2xf32>
      %47 = vector.multi_reduction <add>, %46, %cst_31 [1] : vector<2x128xf32> to vector<2xf32>
      %48 = vector.shape_cast %47 : vector<2xf32> to vector<2x1xf32>
      %49 = math.log %48 : vector<2x1xf32>
      %50 = vector.broadcast %49 : vector<2x1xf32> to vector<2x128xf32>
      %51 = arith.subf %45, %50 : vector<2x128xf32>
      %c0_32 = arith.constant 0 : index
      %c0_33 = arith.constant 0 : index
      %52 = vector.load %arg6[%c0_32, %c0_33] : memref<2x128xf32, #tpu.memory_space<vmem>>, vector<2x128xf32>
      tpu.vector_store %arg6[%c0_32, %c0_33], %51 {strides = array<i32>} : memref<2x128xf32, #tpu.memory_space<vmem>>, vector<2x128xf32>,
    } else {
    }
    return
  }
  func.func @transform_0(%arg0: i32, %arg1: i32) -> (i32, i32) {
    %c0_i32 = arith.constant 0 : i32
    return %arg0, %arg1 : i32, i32
  }
  func.func @transform_1(%arg0: i32, %arg1: i32) -> (i32, i32, i32) {
    %c0_i32 = arith.constant 0 : i32
    %c0_i32_0 = arith.constant 0 : i32
    return %arg0, %arg1, %c0_i32 : i32, i32, i32
  }
  func.func @transform_2(%arg0: i32, %arg1: i32) -> (i32, i32) {
    %c0_i32 = arith.constant 0 : i32
    %c0_i32_0 = arith.constant 0 : i32
    %c0_i32_1 = arith.constant 0 : i32
    return %c0_i32, %c0_i32_0 : i32, i32
  }
  func.func @transform_3(%arg0: i32, %arg1: i32) -> (i32, i32) {
    %c0_i32 = arith.constant 0 : i32
    %c0_i32_0 = arith.constant 0 : i32
    %c0_i32_1 = arith.constant 0 : i32
    return %c0_i32, %c0_i32_0 : i32, i32
  }
  func.func @transform_4(%arg0: i32, %arg1: i32) -> (i32, i32) {
    %c0_i32 = arith.constant 0 : i32
    %c0_i32_0 = arith.constant 0 : i32
    return %arg0, %c0_i32 : i32, i32
  }
}

</mosaic_0001>

<llo_original>
// kernel: tpu_custom_call.1
$region0: #{tpu_custom_call.1}
  #allocation0 [shape = 'u32[]', space=smem, size = 0x4, offset = 0x4, fixed_abs, tag = 'smem constant byte address 0x4 - core index']
  #allocation1 [shape = 'u32[144,128]{1,0:T(1,128)}', space=vmem, size = 0x12000, scoped, tag = 'internal scratch']
  #allocation2 [shape = 'f32[2,32]{1,0:T(2,128)}', space=vmem, size = 0x400, scoped, tag = 'scratch operand']
  #allocation3 [shape = 'f32[2,1]{1,0:T(2,128)}', space=vmem, size = 0x400, scoped, tag = 'scratch operand']
  %s0 = inlined_call_operand.hbm [shape: s32[2,8], index: 0, kind: input, shape index: {}]
  %s1 = inlined_call_operand.hbm [shape: bf16[2,8,32], index: 1, kind: input, shape index: {}]
  %s2 = inlined_call_operand.hbm [shape: f32[32,128], index: 2, kind: input, shape index: {}]
  %s3 = inlined_call_operand.vmem [shape: f32[1,128], index: 3, kind: input, shape index: {}]
  %s4 = inlined_call_operand.hbm [shape: f32[2,128], index: 4, kind: output, shape index: {}]
  %s5 = sld [smem:[#allocation0]]
  $region46: #{tpu_custom_call.1} parent=0
    _
  %s7 = ssub.s32 1, %s5
  %s8 = scalar_select 0, %s7, %s5
  $region1: #{tpu_custom_call.1} parent=0
    #allocation4 [shape = 'u8[1024]{0}', space=vmem, size = 0x400, scoped, tag = 'input window, operand 0, single buffered']
    #allocation5 [shape = 's32[1]{0}', space=sflag, size = 0x4, scoped, tag = 'scoped memory for tpu_custom_call.1']
    #allocation6 [shape = 's32[1]{0}', space=sflag, size = 0x4, scoped, tag = 'scoped memory for tpu_custom_call.1']
    #allocation7 [shape = 'u8[4096]{0}', space=vmem, size = 0x1000, scoped, tag = 'input window, operand 1, single buffered']
    #allocation8 [shape = 's32[1]{0}', space=sflag, size = 0x4, scoped, tag = 'scoped memory for tpu_custom_call.1']
    #allocation9 [shape = 'u8[16384]{0}', space=vmem, size = 0x4000, scoped, tag = 'input window, operand 2, single buffered']
    #allocation10 [shape = 'u8[1024]{0}', space=vmem, size = 0x400, scoped, tag = 'output window, operand 0, single buffered']
    %9 = vsyncpa [#allocation5], 0
    %10 = vsyncpa [#allocation8], 0
    %11 = vsyncpa [#allocation6], 0
    // Predicated region
    $region2: #{tpu_custom_call.1} parent=1 // pred_check
      _
    $region3: #{tpu_custom_call.1} parent=1 // pred_check_branch
      %13 = sbr.rel (0) target = $region5
    $region4: #{tpu_custom_call.1} parent=1 // pred_region
      %s15 = ssub.s32 32, 32
      %16 = vsyncadd [#allocation5], %s15
      %s18 = sshll.u32 [#allocation4], 4
      %s19 = int_to_ptr.vmem [resolvable:$true] %s18
      %21 = dma.hbm_to_vmem [thread:$0]  %s0, 32, %s19, [#allocation5]
    $region5: #{tpu_custom_call.1} parent=1 // pred_fallthru
      _
    // Predicated region
    $region6: #{tpu_custom_call.1} parent=1 // pred_check
      _
    $region7: #{tpu_custom_call.1} parent=1 // pred_check_branch
      %23 = sbr.rel (0) target = $region9
    $region8: #{tpu_custom_call.1} parent=1 // pred_region
      %s25 = ssub.s32 128, 128
      %26 = vsyncadd [#allocation8], %s25
      %s27 = sshll.u32 [#allocation7], 4
      %s28 = int_to_ptr.vmem [resolvable:$true] %s27
      %33 = dma.hbm_to_vmem [thread:$0]  %s1, 128, %s28, [#allocation8], 64, 64, 4
    $region9: #{tpu_custom_call.1} parent=1 // pred_fallthru
      _
    // Predicated region
    $region10: #{tpu_custom_call.1} parent=1 // pred_check
      _
    $region11: #{tpu_custom_call.1} parent=1 // pred_check_branch
      %35 = sbr.rel (0) target = $region13
    $region12: #{tpu_custom_call.1} parent=1 // pred_region
      %s37 = ssub.s32 512, 512
      %38 = vsyncadd [#allocation8], %s37
      %s39 = sshll.u32 [#allocation9], 4
      %s40 = int_to_ptr.vmem [resolvable:$true] %s39
      %45 = dma.hbm_to_vmem [thread:$0]  %s2, 512, %s40, [#allocation8], 128, 128, 8
    $region13: #{tpu_custom_call.1} parent=1 // pred_fallthru
      _
    // Predicated region
    $region14: #{tpu_custom_call.1} parent=1 // pred_check
      _
    $region15: #{tpu_custom_call.1} parent=1 // pred_check_branch
      %47 = sbr.rel (0) target = $region17
    $region16: #{tpu_custom_call.1} parent=1 // pred_region
      _
    $region17: #{tpu_custom_call.1} parent=1 // pred_fallthru
      _
    // Predicated region
    $region18: #{tpu_custom_call.1} parent=1 // pred_check
      _
    $region19: #{tpu_custom_call.1} parent=1 // pred_check_branch
      %49 = sbr.rel (0) target = $region21
    $region20: #{tpu_custom_call.1} parent=1 // pred_region
      %50 = dma.done [#allocation5], 32
    $region21: #{tpu_custom_call.1} parent=1 // pred_fallthru
      _
    // Predicated region
    $region22: #{tpu_custom_call.1} parent=1 // pred_check
      _
    $region23: #{tpu_custom_call.1} parent=1 // pred_check_branch
      %52 = sbr.rel (0) target = $region25
    $region24: #{tpu_custom_call.1} parent=1 // pred_region
      %53 = dma.done [#allocation8], 128
    $region25: #{tpu_custom_call.1} parent=1 // pred_fallthru
      _
    // Predicated region
    $region26: #{tpu_custom_call.1} parent=1 // pred_check
      _
    $region27: #{tpu_custom_call.1} parent=1 // pred_check_branch
      %55 = sbr.rel (0) target = $region29
    $region28: #{tpu_custom_call.1} parent=1 // pred_region
      %56 = dma.done [#allocation8], 512
    $region29: #{tpu_custom_call.1} parent=1 // pred_fallthru
      _
    %p58 = scmp.eq.s32.totalorder 0, 0
    // Predicated region
    $region30: #{tpu_custom_call.1} parent=1 // pred_check
      %p59 = pneg %p58
    $region31: #{tpu_custom_call.1} parent=1 // pred_check_branch
      %61 = sbr.rel (%p59) target = $region33
    $region32: #{tpu_custom_call.1} parent=1 // pred_region
      %vm62 = vcmask 254976
      %63 = vst.msk [vmem:[#allocation2] sm:$0x3] %vm62, 0.0
      %vm64 = vcmask 1024
      %65 = vst.msk [vmem:[#allocation3] sm:$0x3] %vm64, 0.0
    $region33: #{tpu_custom_call.1} parent=1 // pred_fallthru
      _
    %v66 = vld [vmem:[#allocation4] sm:$0x3]
    %vm67 = vcmp.ne.s32.totalorder %v66, 0
    %v68 = vsel %vm67, 1, 0
    %v69 = vcvt.s32.f32 %v68
    %v70 = vpack.c.bf16 %v69, %v69
    %v71 = vld [vmem:[#allocation7] sm:$0xf]
    %vm72 = vcmask 64512
    %v74 = vsel %vm72, %v70, 0
    %vm76 = vcmask 1043456
    %v78 = vsel %vm76, %v71, 0
    %80 = vmatprep.subr.bf16.mxu0 0
    %81 = vmatpush1.bf16.msra.mxu0 0
    %82 = vmatprep.subr.bf16.mxu0 0
    %83 = vmatpush1.bf16.msra.mxu0 0
    %84 = vmatprep.subr.bf16.mxu0 0
    %85 = vmatpush1.bf16.msra.mxu0 0
    %86 = vmatprep.subr.bf16.mxu0 0
    %87 = vmatpush1.bf16.msra.mxu0 0
    %88 = vmatprep.subr.bf16.mxu0 0
    %89 = vmatpush1.bf16.msra.mxu0 0
    %90 = vmatprep.subr.bf16.mxu0 0
    %91 = vmatpush1.bf16.msra.mxu0 0
    %92 = vmatprep.subr.bf16.mxu0 0
    %93 = vmatpush1.bf16.msra.mxu0 0
    %94 = vmatprep.subr.bf16.mxu0 0
    %95 = vmatpush1.bf16.msra.mxu0 %v78
    %96 = vmatprep.subr.bf16.mxu0 0
    %97 = vmatpush2.bf16.msra.mxu0 0
    %98 = vmatprep.subr.bf16.mxu0 0
    %99 = vmatpush2.bf16.msra.mxu0 0
    %100 = vmatprep.subr.bf16.mxu0 0
    %101 = vmatpush2.bf16.msra.mxu0 0
    %102 = vmatprep.subr.bf16.mxu0 0
    %103 = vmatpush2.bf16.msra.mxu0 0
    %104 = vmatprep.subr.bf16.mxu0 0
    %105 = vmatpush2.bf16.msra.mxu0 0
    %106 = vmatprep.subr.bf16.mxu0 0
    %107 = vmatpush2.bf16.msra.mxu0 0
    %108 = vmatprep.subr.bf16.mxu0 0
    %109 = vmatpush2.bf16.msra.mxu0 0
    %110 = vmatprep.subr.bf16.mxu0 0
    %111 = vmatpush2.bf16.msra.mxu0 0
    %112 = vmatprep.mubr.bf16.mxu0 0
    %113 = vmatmul.mubr.bf16.gmra.mxu0 %v74
    %v114 = vpop.f32.mrf.mxu0
    %v115 = vadd.f32 0.0, %v114
    %v116 = vpop.f32.mrf.mxu0
    %v117 = vpop.f32.mrf.mxu0
    %v118 = vpop.f32.mrf.mxu0
    %119 = vdwg.mxu0
    %s120 = scalar_lea.vmem [#allocation7], 4
    %v121 = vld [vmem:[%s120] sm:$0xf]
    %v122 = vshrl.u32 %v70, 16
    %v125 = vsel %vm72, %v122, 0
    %v128 = vsel %vm76, %v121, 0
    %130 = vmatprep.subr.bf16.mxu0 0
    %131 = vmatpush1.bf16.msra.mxu0 0
    %132 = vmatprep.subr.bf16.mxu0 0
    %133 = vmatpush1.bf16.msra.mxu0 0
    %134 = vmatprep.subr.bf16.mxu0 0
    %135 = vmatpush1.bf16.msra.mxu0 0
    %136 = vmatprep.subr.bf16.mxu0 0
    %137 = vmatpush1.bf16.msra.mxu0 0
    %138 = vmatprep.subr.bf16.mxu0 0
    %139 = vmatpush1.bf16.msra.mxu0 0
    %140 = vmatprep.subr.bf16.mxu0 0
    %141 = vmatpush1.bf16.msra.mxu0 0
    %142 = vmatprep.subr.bf16.mxu0 0
    %143 = vmatpush1.bf16.msra.mxu0 0
    %144 = vmatprep.subr.bf16.mxu0 0
    %145 = vmatpush1.bf16.msra.mxu0 %v128
    %146 = vmatprep.subr.bf16.mxu0 0
    %147 = vmatpush2.bf16.msra.mxu0 0
    %148 = vmatprep.subr.bf16.mxu0 0
    %149 = vmatpush2.bf16.msra.mxu0 0
    %150 = vmatprep.subr.bf16.mxu0 0
    %151 = vmatpush2.bf16.msra.mxu0 0
    %152 = vmatprep.subr.bf16.mxu0 0
    %153 = vmatpush2.bf16.msra.mxu0 0
    %154 = vmatprep.subr.bf16.mxu0 0
    %155 = vmatpush2.bf16.msra.mxu0 0
    %156 = vmatprep.subr.bf16.mxu0 0
    %157 = vmatpush2.bf16.msra.mxu0 0
    %158 = vmatprep.subr.bf16.mxu0 0
    %159 = vmatpush2.bf16.msra.mxu0 0
    %160 = vmatprep.subr.bf16.mxu0 0
    %161 = vmatpush2.bf16.msra.mxu0 0
    %162 = vmatprep.mubr.bf16.mxu0 0
    %163 = vmatmul.mubr.bf16.gmra.mxu0 %v125
    %v164 = vpop.f32.mrf.mxu0
    %v165 = vadd.f32 0.0, %v164
    %v166 = vpop.f32.mrf.mxu0
    %v167 = vpop.f32.mrf.mxu0
    %v168 = vpop.f32.mrf.mxu0
    %169 = vdwg.mxu0
    %v171 = vrot.slane %v165, 7
    %vm173 = vcmask 1040384
    %v174 = vsel %vm173, %v115, %v171
    %v175 = vld [vmem:[#allocation2] sm:$0x3]
    %v176 = vadd.f32 %v175, %v174
    %vm177 = vcmask 254976
    %178 = vst.msk [vmem:[#allocation2] sm:$0x3] %vm177, %v176
    %v179 = vld [vmem:[#allocation3] sm:$0x3]
    %vm180 = vcmask 58368
    %v181 = vsel %vm180, %v69, 0.0
    %182 = vadd.xlane.f32.xlu0 %v181
    %v183 = vpop.xlane.xlu0 %182
    %v184 = vadd.f32 %v179, %v183
    %vm185 = vcmask 1024
    %186 = vst.msk [vmem:[#allocation3] sm:$0x3] %vm185, %v184
    // Predicated region
    $region34: #{tpu_custom_call.1} parent=1 // pred_check
      %p187 = pneg %p58
    $region35: #{tpu_custom_call.1} parent=1 // pred_check_branch
      %189 = sbr.rel (%p187) target = $region37
    $region36: #{tpu_custom_call.1} parent=1 // pred_region
      %v190 = vld [vmem:[#allocation2] sm:$0x3]
      %v191 = vld [vmem:[#allocation3] sm:$0x3]
      %v192 = vadd.f32 %v191, 1e-10
      %194 = vset.pattern.permute.xlu0 0
      %195 = vperm.xlu0 %194, %v192
      %v196 = vpop.permute.xlu0 %195
      %v198 = vrcp.pop %v196
      %v199 = vmul.f32 %v190, %v198
      %v200 = vld [vmem:[#allocation9] sm:$0xff]
      %v201 = vld [vmem:[#allocation9 + $0x8] sm:$0xff]
      %v202 = vld [vmem:[#allocation9 + $0x10] sm:$0xff]
      %v203 = vld [vmem:[#allocation9 + $0x18] sm:$0xff]
      %v204 = vld [vmem:[%s3] sm:$0x1]
      %v206 = vlaneseq
      %v207 = vshrl.u32 %v206, 7
      %v208 = vsub.s32 0, %v207
      %v209 = vrot.slane %v204, %v208
      %vm211 = vcmask 261120
      %v213 = vsel %vm211, %v199, 0
      %215 = vmatprep.subr.mxu0 0.0
      %216 = vmatpush1.msra.mxu0 0.0
      %217 = vmatprep.subr.mxu0 0.0
      %218 = vmatpush1.msra.mxu0 0.0
      %219 = vmatprep.subr.mxu0 0.0
      %220 = vmatpush1.msra.mxu0 0.0
      %221 = vmatprep.subr.mxu0 0.0
      %222 = vmatpush1.msra.mxu0 0.0
      %223 = vmatprep.subr.mxu0 0.0
      %224 = vmatpush1.msra.mxu0 0.0
      %225 = vmatprep.subr.mxu0 0.0
      %226 = vmatpush1.msra.mxu0 0.0
      %227 = vmatprep.subr.mxu0 0.0
      %228 = vmatpush1.msra.mxu0 0.0
      %229 = vmatprep.subr.mxu0 0.0
      %230 = vmatpush1.msra.mxu0 0.0
      %231 = vmatprep.subr.mxu0 0.0
      %232 = vmatpush1.msra.mxu0 0.0
      %233 = vmatprep.subr.mxu0 0.0
      %234 = vmatpush1.msra.mxu0 0.0
      %235 = vmatprep.subr.mxu0 0.0
      %236 = vmatpush1.msra.mxu0 0.0
      %237 = vmatprep.subr.mxu0 0.0
      %238 = vmatpush1.msra.mxu0 0.0
      %239 = vmatprep.subr.mxu0 0.0
      %240 = vmatpush1.msra.mxu0 %v203
      %241 = vmatprep.subr.mxu0 0.0
      %242 = vmatpush1.msra.mxu0 %v202
      %243 = vmatprep.subr.mxu0 0.0
      %244 = vmatpush1.msra.mxu0 %v201
      %245 = vmatprep.subr.mxu0 0.0
      %246 = vmatpush1.msra.mxu0 %v200
      %247 = vmatprep.subr.mxu0 0.0
      %248 = vmatpush2.msra.mxu0 0.0
      %249 = vmatprep.subr.mxu0 0.0
      %250 = vmatpush2.msra.mxu0 0.0
      %251 = vmatprep.subr.mxu0 0.0
      %252 = vmatpush2.msra.mxu0 0.0
      %253 = vmatprep.subr.mxu0 0.0
      %254 = vmatpush2.msra.mxu0 0.0
      %255 = vmatprep.subr.mxu0 0.0
      %256 = vmatpush2.msra.mxu0 0.0
      %257 = vmatprep.subr.mxu0 0.0
      %258 = vmatpush2.msra.mxu0 0.0
      %259 = vmatprep.subr.mxu0 0.0
      %260 = vmatpush2.msra.mxu0 0.0
      %261 = vmatprep.subr.mxu0 0.0
      %262 = vmatpush2.msra.mxu0 0.0
      %263 = vmatprep.subr.mxu0 0.0
      %264 = vmatpush2.msra.mxu0 0.0
      %265 = vmatprep.subr.mxu0 0.0
      %266 = vmatpush2.msra.mxu0 0.0
      %267 = vmatprep.subr.mxu0 0.0
      %268 = vmatpush2.msra.mxu0 0.0
      %269 = vmatprep.subr.mxu0 0.0
      %270 = vmatpush2.msra.mxu0 0.0
      %271 = vmatprep.subr.mxu0 0.0
      %272 = vmatpush2.msra.mxu0 0.0
      %273 = vmatprep.subr.mxu0 0.0
      %274 = vmatpush2.msra.mxu0 0.0
      %275 = vmatprep.subr.mxu0 0.0
      %276 = vmatpush2.msra.mxu0 0.0
      %277 = vmatprep.subr.mxu0 0.0
      %278 = vmatpush2.msra.mxu0 0.0
      %279 = vmatprep.mubr.f32.mxu0 0.0
      %280 = vmatmul.mubr.f32.gmra.mxu0 %v213
      %v281 = vpop.f32.mrf.mxu0
      %v282 = vadd.f32 %v209, %v281
      %v283 = vpop.f32.mrf.mxu0
      %284 = vdwg.mxu0
      %vm285 = vcmask 1041408
      %v286 = vsel %vm285, %v282, -inf
      %287 = vmax.xlane.f32.xlu0 %v286
      %v288 = vpop.xlane.xlu0 %287
      %v289 = vsub.f32 %v282, %v288
      %v290 = vmul.f32 %v289, 1.442695
      %v291 = vpow.pop %v290
      %v292 = vsel %vm285, %v291, 0.0
      %293 = vadd.xlane.f32.xlu0 %v292
      %v294 = vpop.xlane.xlu0 %293
      %v295 = vlog2.pop %v294
      %v296 = vmul.f32 %v295, 0.6931472
      %v297 = vsub.f32 %v289, %v296
      %298 = vst [vmem:[#allocation10] sm:$0x3] %v297
    $region37: #{tpu_custom_call.1} parent=1 // pred_fallthru
      _
    // Predicated region
    $region38: #{tpu_custom_call.1} parent=1 // pred_check
      _
    $region39: #{tpu_custom_call.1} parent=1 // pred_check_branch
      %300 = sbr.rel (0) target = $region41
    $region40: #{tpu_custom_call.1} parent=1 // pred_region
      %s302 = ssub.s32 32, 32
      %303 = vsyncadd [#allocation6], %s302
      %s305 = sshll.u32 [#allocation10], 4
      %s306 = int_to_ptr.vmem [resolvable:$true] %s305
      %308 = dma.vmem_to_hbm [thread:$0]  %s306, 32, %s4, [#allocation6]
    $region41: #{tpu_custom_call.1} parent=1 // pred_fallthru
      _
    // Predicated region
    $region42: #{tpu_custom_call.1} parent=1 // pred_check
      _
    $region43: #{tpu_custom_call.1} parent=1 // pred_check_branch
      %310 = sbr.rel (0) target = $region45
    $region44: #{tpu_custom_call.1} parent=1 // pred_region
      %311 = dma.done [#allocation6], 32
    $region45: #{tpu_custom_call.1} parent=1 // pred_fallthru
      _
    %312 = vsyncpa [#allocation5], 1
    %313 = vsyncpa [#allocation8], 1
    %314 = vsyncpa [#allocation6], 1

</llo_original>
